<compile_context>
chip_gen: v5e
topology: v5e:2x2
jax: 0.10.0
libtpu: 0.0.40
codegen_flags: <defaults>
</compile_context>

<pallas_src>
import functools

import jax
import jax.numpy as jnp
from jax.experimental import pallas as pl
from jax.experimental.pallas import tpu as pltpu

LANES = 128
MAX_BLOCK_ROWS_F32 = 2048      # 2 inputs x 2 buffers x 1 MiB = 4 MiB
MAX_BLOCK_ROWS_NARROW = 4096   # bf16/int8/bool: same ~4 MiB footprint
NUM_CORES = 2                  # leading core-split axis


def _leading_axis_semantics():
    """CORE_PARALLEL on v7x-class chips (2 TensorCores/chip); PARALLEL elsewhere."""
    try:
        kind = jax.devices()[0].device_kind.lower()
    except Exception:
        kind = ""
    if "7" in kind:
        return pltpu.CORE_PARALLEL
    return pltpu.PARALLEL


def _dice_partial_kernel(pred_ref, targ_ref, out_ref, acc_pt, acc_un, *,
                         inner, num_blocks, block_rows, acc_rows, edge_rows):
    c = pl.program_id(0)   # core / outer split
    i = pl.program_id(1)   # streaming axis

    @pl.when(i == 0)
    def _():
        acc_pt[...] = jnp.zeros_like(acc_pt)
        acc_un[...] = jnp.zeros_like(acc_un)

    blk = c * inner + i    # logical block handled this step

    def accumulate(p, t):
        pt = p * t
        un = p + t
        if block_rows != acc_rows:
            # (block_rows,128) -> (block_rows//acc_rows, acc_rows, 128) is
            # aligned to vreg tiling (stays a view); axis-0 sum is pure VALU
            # adds with no cross-lane work.
            pt = jnp.sum(pt.reshape(block_rows // acc_rows, acc_rows, LANES), axis=0)
            un = jnp.sum(un.reshape(block_rows // acc_rows, acc_rows, LANES), axis=0)
        acc_pt[...] += pt
        acc_un[...] += un

    # Skip compute entirely for clamped / out-of-range duplicate blocks.
    @pl.when(blk < num_blocks)
    def _():
        x = pred_ref[...].astype(jnp.float32)
        t = targ_ref[...].astype(jnp.float32)
        # sigmoid(x) == 0.5 * (tanh(x/2) + 1): one EUP push + two VALU ops.
        p = 0.5 * jnp.tanh(0.5 * x) + 0.5

        if edge_rows:
            # Only the single partial edge block pays for iota/compare/select
            # (its OOB rows hold unspecified data and must be zeroed before
            # the multiply/add; where-select blocks NaN propagation).
            @pl.when(blk == num_blocks - 1)
            def _():
                row = jax.lax.broadcasted_iota(jnp.int32, (block_rows, LANES), 0)
                valid = row < edge_rows
                accumulate(jnp.where(valid, p, 0.0), jnp.where(valid, t, 0.0))

            @pl.when(blk != num_blocks - 1)
            def _():
                accumulate(p, t)
        else:
            accumulate(p, t)

    @pl.when(i == pl.num_programs(1) - 1)
    def _():
        s_pt = jnp.sum(acc_pt[...])
        s_un = jnp.sum(acc_un[...])
        lane = jax.lax.broadcasted_iota(jnp.int32, out_ref.shape, 2)
        out_ref[...] = jnp.where(lane == 0, s_pt,
                                 jnp.where(lane == 1, s_un, 0.0))


def dice_loss(prediction, target, smooth=1e-08):
    assert prediction.shape == target.shape
    total = prediction.size

    # Keep native dtypes (bf16 / int8 / bool are fine); cast happens in-kernel.
    pred_flat = prediction.reshape(-1)
    targ_flat = target.reshape(-1)

    rows = total // LANES
    rem = total % LANES

    sum_pt = jnp.float32(0.0)
    sum_union = jnp.float32(0.0)

    if rows > 0:
        pred2d = pred_flat[:rows * LANES].reshape(rows, LANES)
        targ2d = targ_flat[:rows * LANES].reshape(rows, LANES)

        itemsize = max(jnp.dtype(prediction.dtype).itemsize,
                       jnp.dtype(target.dtype).itemsize)
        max_rows = MAX_BLOCK_ROWS_F32 if itemsize >= 4 else MAX_BLOCK_ROWS_NARROW
        block_rows = rows if rows <= max_rows else max_rows
        num_blocks = pl.cdiv(rows, block_rows)
        inner = pl.cdiv(num_blocks, NUM_CORES)
        edge_rows = rows % block_rows              # 0 => last block is full
        acc_rows = 8 if block_rows % 8 == 0 else block_rows

        def blk_map(c, i):
            # Clamp so the DMA never walks past the array; out-of-range
            # logical blocks skip their compute inside the kernel.
            return (jnp.minimum(c * inner + i, num_blocks - 1), 0)

        kernel = functools.partial(
            _dice_partial_kernel,
            inner=inner, num_blocks=num_blocks, block_rows=block_rows,
            acc_rows=acc_rows, edge_rows=edge_rows)

        partials = pl.pallas_call(
            kernel,
            out_shape=jax.ShapeDtypeStruct((NUM_CORES, 1, LANES), jnp.float32),
            grid_spec=pltpu.PrefetchScalarGridSpec(
                num_scalar_prefetch=0,
                grid=(NUM_CORES, inner),
                in_specs=[
                    pl.BlockSpec((block_rows, LANES), blk_map),
                    pl.BlockSpec((block_rows, LANES), blk_map),
                ],
                out_specs=pl.BlockSpec((1, 1, LANES), lambda c, i: (c, 0, 0)),
                scratch_shapes=[
                    pltpu.VMEM((acc_rows, LANES), jnp.float32),
                    pltpu.VMEM((acc_rows, LANES), jnp.float32),
                ],
            ),
            compiler_params=pltpu.CompilerParams(
                dimension_semantics=(_leading_axis_semantics(),
                                     pltpu.ARBITRARY)),
        )(pred2d, targ2d)

        sum_pt = jnp.sum(partials[:, 0, 0])
        sum_union = jnp.sum(partials[:, 0, 1])

    if rem:
        # <128-element tail handled with plain jnp (no full-array pad copy).
        p_tail = jax.nn.sigmoid(pred_flat[rows * LANES:].astype(jnp.float32))
        t_tail = targ_flat[rows * LANES:].astype(jnp.float32)
        sum_pt = sum_pt + jnp.sum(p_tail * t_tail)
        sum_union = sum_union + jnp.sum(p_tail) + jnp.sum(t_tail)

    intersection = 2.0 * sum_pt + smooth
    union = sum_union + smooth
    return (1.0 - intersection / union).astype(jnp.float32)


def dice_loss_ref(prediction, target, smooth=1e-08):
    p = jax.nn.sigmoid(prediction.astype(jnp.float32))
    t = target.astype(jnp.float32)
    intersection = 2.0 * jnp.sum(p * t) + smooth
    union = jnp.sum(p) + jnp.sum(t) + smooth
    return 1.0 - intersection / union


if __name__ == "__main__":
    key = jax.random.PRNGKey(0)

    # Primary check: NCHW segmentation logits/masks (lane-aligned total).
    k1, k2 = jax.random.split(key)
    prediction = jax.random.normal(k1, (2, 4, 16, 16), dtype=jnp.float32)
    target = (jax.random.uniform(k2, (2, 4, 16, 16)) > 0.5).astype(jnp.float32)
    loss = jax.block_until_ready(dice_loss(prediction, target))
    ref = jax.block_until_ready(dice_loss_ref(prediction, target))
    assert jnp.allclose(loss, ref, atol=1e-5, rtol=1e-5), (loss, ref)

    # Unaligned total (exercises the wrapper-side tail path, no pad copy).
    k3, k4 = jax.random.split(k1)
    p2 = jax.random.normal(k3, (2, 3, 17, 19), dtype=jnp.float32)
    t2 = (jax.random.uniform(k4, (2, 3, 17, 19)) > 0.5).astype(jnp.float32)
    l2 = jax.block_until_ready(dice_loss(p2, t2))
    r2 = jax.block_until_ready(dice_loss_ref(p2, t2))
    assert jnp.allclose(l2, r2, atol=1e-5, rtol=1e-5), (l2, r2)

    # Multi-block with a partial edge block (exercises the masked edge path
    # and the per-core split).
    k5, k6 = jax.random.split(k2)
    p3 = jax.random.normal(k5, (4, 4, 160, 160), dtype=jnp.float32)
    t3 = (jax.random.uniform(k6, (4, 4, 160, 160)) > 0.5).astype(jnp.float32)
    l3 = jax.block_until_ready(dice_loss(p3, t3))
    r3 = jax.block_until_ready(dice_loss_ref(p3, t3))
    assert jnp.allclose(l3, r3, atol=5e-5, rtol=5e-5), (l3, r3)

    print("KERNEL_OK")
</pallas_src>

<mosaic_0001>
module attributes {stable_mosaic.version = 11 : i64} {
  func.func @_dice_partial_kernel(%arg0: i32, %arg1: i32, %arg2: memref<16x128xf32, #tpu.memory_space<vmem>>, %arg3: memref<16x128xf32, #tpu.memory_space<vmem>>, %arg4: memref<1x1x128xf32, #tpu.memory_space<vmem>>, %arg5: memref<8x128xf32, #tpu.memory_space<vmem>>, %arg6: memref<8x128xf32, #tpu.memory_space<vmem>>) attributes {dimension_semantics = [#tpu.dimension_semantics<parallel>, #tpu.dimension_semantics<arbitrary>], iteration_bounds = array<i64: 2, 1>, scalar_prefetch = 0 : i64, scratch_operands = 2 : i64, tpu.core_type = #tpu.core_type<tc>, window_params = [{transform_indices = @transform_0, window_bounds = array<i64: 16, 128>}, {transform_indices = @transform_1, window_bounds = array<i64: 16, 128>}, {transform_indices = @transform_2, window_bounds = array<i64: 1, 1, 128>}]} {
    %c0_i32 = arith.constant 0 : i32
    %0 = arith.cmpi eq, %arg1, %c0_i32 : i32
    %1 = arith.extui %0 : i1 to i32
    %c0_i32_0 = arith.constant 0 : i32
    %2 = arith.cmpi ne, %1, %c0_i32_0 : i32
    scf.if %2 {
      %cst = arith.constant 0.000000e+00 : f32
      %11 = vector.broadcast %cst : f32 to vector<8x128xf32>
      %c0 = arith.constant 0 : index
      %c0_5 = arith.constant 0 : index
      %12 = vector.load %arg5[%c0, %c0_5] : memref<8x128xf32, #tpu.memory_space<vmem>>, vector<8x128xf32>
      tpu.vector_store %arg5[%c0, %c0_5], %11 {strides = array<i32>} : memref<8x128xf32, #tpu.memory_space<vmem>>, vector<8x128xf32>,
      %cst_6 = arith.constant 0.000000e+00 : f32
      %13 = vector.broadcast %cst_6 : f32 to vector<8x128xf32>
      %c0_7 = arith.constant 0 : index
      %c0_8 = arith.constant 0 : index
      %14 = vector.load %arg6[%c0_7, %c0_8] : memref<8x128xf32, #tpu.memory_space<vmem>>, vector<8x128xf32>
      tpu.vector_store %arg6[%c0_7, %c0_8], %13 {strides = array<i32>} : memref<8x128xf32, #tpu.memory_space<vmem>>, vector<8x128xf32>,
    } else {
    }
    %c1_i32 = arith.constant 1 : i32
    %3 = arith.muli %arg0, %c1_i32 : i32
    %4 = arith.addi %3, %arg1 : i32
    %c1_i32_1 = arith.constant 1 : i32
    %5 = arith.cmpi slt, %4, %c1_i32_1 : i32
    %6 = arith.extui %5 : i1 to i32
    %c0_i32_2 = arith.constant 0 : i32
    %7 = arith.cmpi ne, %6, %c0_i32_2 : i32
    scf.if %7 {
      %c0 = arith.constant 0 : index
      %c0_5 = arith.constant 0 : index
      %11 = vector.load %arg2[%c0, %c0_5] : memref<16x128xf32, #tpu.memory_space<vmem>>, vector<16x128xf32>
      %c0_6 = arith.constant 0 : index
      %c0_7 = arith.constant 0 : index
      %12 = vector.load %arg3[%c0_6, %c0_7] : memref<16x128xf32, #tpu.memory_space<vmem>>, vector<16x128xf32>
      %cst = arith.constant 5.000000e-01 : f32
      %13 = vector.broadcast %cst : f32 to vector<16x128xf32>
      %14 = arith.mulf %13, %11 : vector<16x128xf32>
      %15 = math.tanh %14 : vector<16x128xf32>
      %cst_8 = arith.constant 5.000000e-01 : f32
      %16 = vector.broadcast %cst_8 : f32 to vector<16x128xf32>
      %17 = arith.mulf %16, %15 : vector<16x128xf32>
      %cst_9 = arith.constant 5.000000e-01 : f32
      %18 = vector.broadcast %cst_9 : f32 to vector<16x128xf32>
      %19 = arith.addf %17, %18 : vector<16x128xf32>
      %20 = arith.mulf %19, %12 : vector<16x128xf32>
      %21 = arith.addf %19, %12 : vector<16x128xf32>
      %22 = vector.shape_cast %20 : vector<16x128xf32> to vector<2x8x128xf32>
      %cst_10 = arith.constant dense<0.000000e+00> : vector<8x128xf32>
      %23 = vector.multi_reduction <add>, %22, %cst_10 [0] : vector<2x8x128xf32> to vector<8x128xf32>
      %24 = vector.shape_cast %21 : vector<16x128xf32> to vector<2x8x128xf32>
      %cst_11 = arith.constant dense<0.000000e+00> : vector<8x128xf32>
      %25 = vector.multi_reduction <add>, %24, %cst_11 [0] : vector<2x8x128xf32> to vector<8x128xf32>
      %c0_12 = arith.constant 0 : index
      %c0_13 = arith.constant 0 : index
      %26 = vector.load %arg5[%c0_12, %c0_13] : memref<8x128xf32, #tpu.memory_space<vmem>>, vector<8x128xf32>
      %27 = arith.addf %26, %23 : vector<8x128xf32>
      %c0_14 = arith.constant 0 : index
      %c0_15 = arith.constant 0 : index
      %28 = vector.load %arg5[%c0_14, %c0_15] : memref<8x128xf32, #tpu.memory_space<vmem>>, vector<8x128xf32>
      tpu.vector_store %arg5[%c0_14, %c0_15], %27 {strides = array<i32>} : memref<8x128xf32, #tpu.memory_space<vmem>>, vector<8x128xf32>,
      %c0_16 = arith.constant 0 : index
      %c0_17 = arith.constant 0 : index
      %29 = vector.load %arg6[%c0_16, %c0_17] : memref<8x128xf32, #tpu.memory_space<vmem>>, vector<8x128xf32>
      %30 = arith.addf %29, %25 : vector<8x128xf32>
      %c0_18 = arith.constant 0 : index
      %c0_19 = arith.constant 0 : index
      %31 = vector.load %arg6[%c0_18, %c0_19] : memref<8x128xf32, #tpu.memory_space<vmem>>, vector<8x128xf32>
      tpu.vector_store %arg6[%c0_18, %c0_19], %30 {strides = array<i32>} : memref<8x128xf32, #tpu.memory_space<vmem>>, vector<8x128xf32>,
    } else {
    }
    %c0_i32_3 = arith.constant 0 : i32
    %8 = arith.cmpi eq, %arg1, %c0_i32_3 : i32
    %9 = arith.extui %8 : i1 to i32
    %c0_i32_4 = arith.constant 0 : i32
    %10 = arith.cmpi ne, %9, %c0_i32_4 : i32
    scf.if %10 {
      %c0 = arith.constant 0 : index
      %c0_5 = arith.constant 0 : index
      %11 = vector.load %arg5[%c0, %c0_5] : memref<8x128xf32, #tpu.memory_space<vmem>>, vector<8x128xf32>
      %12 = vector.shape_cast %11 : vector<8x128xf32> to vector<1x8x128xf32>
      %cst = arith.constant dense<0.000000e+00> : vector<1xf32>
      %13 = vector.multi_reduction <add>, %12, %cst [1, 2] : vector<1x8x128xf32> to vector<1xf32>
      %14 = vector.shape_cast %13 : vector<1xf32> to vector<1x1x1xf32>
      %15 = vector.extract %14[0, 0, 0] : f32 from vector<1x1x1xf32>
      %c0_6 = arith.constant 0 : index
      %c0_7 = arith.constant 0 : index
      %16 = vector.load %arg6[%c0_6, %c0_7] : memref<8x128xf32, #tpu.memory_space<vmem>>, vector<8x128xf32>
      %17 = vector.shape_cast %16 : vector<8x128xf32> to vector<1x8x128xf32>
      %cst_8 = arith.constant dense<0.000000e+00> : vector<1xf32>
      %18 = vector.multi_reduction <add>, %17, %cst_8 [1, 2] : vector<1x8x128xf32> to vector<1xf32>
      %19 = vector.shape_cast %18 : vector<1xf32> to vector<1x1x1xf32>
      %20 = vector.extract %19[0, 0, 0] : f32 from vector<1x1x1xf32>
      %21 = tpu.iota {dimensions = array<i32: 2>} : vector<1x1x128xi32>
      %c0_i32_9 = arith.constant 0 : i32
      %22 = vector.broadcast %c0_i32_9 : i32 to vector<1x1x128xi32>
      %23 = arith.cmpi eq, %21, %22 : vector<1x1x128xi32>
      %c1_i32_10 = arith.constant 1 : i32
      %24 = vector.broadcast %c1_i32_10 : i32 to vector<1x1x128xi32>
      %25 = arith.cmpi eq, %21, %24 : vector<1x1x128xi32>
      %cst_11 = arith.constant 0.000000e+00 : f32
      %26 = vector.broadcast %20 : f32 to vector<1x1x128xf32>
      %27 = vector.broadcast %cst_11 : f32 to vector<1x1x128xf32>
      %28 = arith.select %25, %26, %27 : vector<1x1x128xi1>, vector<1x1x128xf32>
      %29 = vector.broadcast %15 : f32 to vector<1x1x128xf32>
      %30 = arith.select %23, %29, %28 : vector<1x1x128xi1>, vector<1x1x128xf32>
      %c0_12 = arith.constant 0 : index
      %c0_13 = arith.constant 0 : index
      %c0_14 = arith.constant 0 : index
      %31 = vector.load %arg4[%c0_12, %c0_13, %c0_14] : memref<1x1x128xf32, #tpu.memory_space<vmem>>, vector<1x1x128xf32>
      tpu.vector_store %arg4[%c0_12, %c0_13, %c0_14], %30 {strides = array<i32>} : memref<1x1x128xf32, #tpu.memory_space<vmem>>, vector<1x1x128xf32>,
    } else {
    }
    return
  }
  func.func @transform_0(%arg0: i32, %arg1: i32) -> (i32, i32) {
    %c1_i32 = arith.constant 1 : i32
    %0 = arith.muli %arg0, %c1_i32 : i32
    %1 = arith.addi %0, %arg1 : i32
    %c0_i32 = arith.constant 0 : i32
    %2 = arith.minsi %1, %c0_i32 : i32
    %c0_i32_0 = arith.constant 0 : i32
    %c0_i32_1 = arith.constant 0 : i32
    return %2, %c0_i32_0 : i32, i32
  }
  func.func @transform_1(%arg0: i32, %arg1: i32) -> (i32, i32) {
    %c1_i32 = arith.constant 1 : i32
    %0 = arith.muli %arg0, %c1_i32 : i32
    %1 = arith.addi %0, %arg1 : i32
    %c0_i32 = arith.constant 0 : i32
    %2 = arith.minsi %1, %c0_i32 : i32
    %c0_i32_0 = arith.constant 0 : i32
    %c0_i32_1 = arith.constant 0 : i32
    return %2, %c0_i32_0 : i32, i32
  }
  func.func @transform_2(%arg0: i32, %arg1: i32) -> (i32, i32, i32) {
    %c0_i32 = arith.constant 0 : i32
    %c0_i32_0 = arith.constant 0 : i32
    %c0_i32_1 = arith.constant 0 : i32
    return %arg0, %c0_i32, %c0_i32_0 : i32, i32, i32
  }
}

</mosaic_0001>

<llo_original>
// kernel: tpu_custom_call.1
$region0: #{tpu_custom_call.1}
  #allocation0 [shape = 'u32[]', space=smem, size = 0x4, offset = 0x4, fixed_abs, tag = 'smem constant byte address 0x4 - core index']
  #allocation1 [shape = 'u32[72,128]{1,0:T(1,128)}', space=vmem, size = 0x9000, scoped, tag = 'internal scratch']
  #allocation2 [shape = 'f32[8,128]{1,0:T(8,128)}', space=vmem, size = 0x1000, scoped, tag = 'scratch operand']
  #allocation3 [shape = 'f32[8,128]{1,0:T(8,128)}', space=vmem, size = 0x1000, scoped, tag = 'scratch operand']
  %s0 = inlined_call_operand.hbm [shape: f32[16,128], index: 0, kind: input, shape index: {}]
  %s1 = inlined_call_operand.hbm [shape: f32[16,128], index: 1, kind: input, shape index: {}]
  %s2 = inlined_call_operand.hbm [shape: f32[2,1,128], index: 2, kind: output, shape index: {}]
  %s3 = sld [smem:[#allocation0]]
  $region61: #{tpu_custom_call.1} parent=0
    _
  %s5 = ssub.s32 1, %s3
  %s6 = scalar_select 0, %s5, %s3
  $region1: #{tpu_custom_call.1} parent=0
    #allocation4 [shape = 'u8[16384]{0}', space=vmem, size = 0x4000, scoped, tag = 'input window, operand 0']
    #allocation5 [shape = 's32[2]{0}', space=sflag, size = 0x8, scoped, tag = 'scoped memory for tpu_custom_call.1']
    #allocation6 [shape = 's32[2]{0}', space=sflag, size = 0x8, scoped, tag = 'scoped memory for tpu_custom_call.1']
    #allocation7 [shape = 'u8[16384]{0}', space=vmem, size = 0x4000, scoped, tag = 'input window, operand 1']
    #allocation8 [shape = 's32[2]{0}', space=sflag, size = 0x8, scoped, tag = 'scoped memory for tpu_custom_call.1']
    #allocation9 [shape = 'u8[1024]{0}', space=vmem, size = 0x400, scoped, tag = 'output window, operand 0']
    %7 = vsyncpa [#allocation5], 0
    %s8 = scalar_lea.sflag [#allocation5], 1
    %9 = vsyncpa %s8, 0
    %10 = vsyncpa [#allocation8], 0
    %s11 = scalar_lea.sflag [#allocation8], 1
    %12 = vsyncpa %s11, 0
    %13 = vsyncpa [#allocation6], 0
    %s14 = scalar_lea.sflag [#allocation6], 1
    %15 = vsyncpa %s14, 0
    loop: start=0, step=1, limit=4
    $region2: #{tpu_custom_call.1} parent=1 // loop_pre_header
      _
    $region3: #{tpu_custom_call.1} parent=1 // loop_header
      %s17 = sphi 0, %s21
      %p18 = scmp.ge.s32.totalorder %s17, 4
      %s24 = sphi 0, %s36
      %s25 = sphi 0, %s32
      %s26 = sphi 0, %s24
      %s27 = sphi 0, %s25
      %s28 = sphi 0, %s26
      %s29 = sphi 0, %s27
      %s45 = sphi 0, %s47
      %s48 = sphi 0, %s45
      %s49 = sphi 0, %s48
      %s65 = sphi 0, %s49
      %s77 = sphi 0, %s79
      %s80 = sphi 0, %s77
      %s81 = sphi 0, %s80
      %s97 = sphi 0, %s81
      %s103 = sphi 0, %s105
      %s106 = sphi 0, %s103
      %s107 = sphi 0, %s106
      %s123 = sphi 0, %s107
    $region4: #{tpu_custom_call.1} parent=1 // loop_header_branch
      %20 = sbr.rel (%p18) target = $region8
    $region5: #{tpu_custom_call.1} parent=1 // loop_body
      %s22 = ssub.s32 %s17, 1
      %s23 = ssub.s32 %s17, 2
      %s30 = sadd.s32 1, %s25
      %p31 = scmp.ge.s32.totalorder %s30, 1
      %s32 = scalar_select %p31, 0, %s30
      %s33 = sadd.s32 1, %s24
      %s34 = scalar_select %p31, %s33, %s24
      %p35 = scmp.ge.s32.totalorder %s34, 2
      %s36 = scalar_select %p35, 0, %s34
      %s37 = sadd.s32 %s24, %s25
      %p38 = scmp.lt.s32.totalorder %s37, 0
      %s39 = scalar_select %p38, %s37, 0
      %s40 = sadd.s32 %s36, %s32
      %p41 = scmp.lt.s32.totalorder %s40, 0
      %s42 = scalar_select %p41, %s40, 0
      %s43 = ssub.s32 %s39, %s42
      %p44 = scmp.eq.s32.totalorder %s43, 0
      %s46 = sadd.s32 %s45, 1
      %s47 = scalar_select %p44, %s45, %s46
      %p50 = pneg %p44
      %p51 = scmp.eq.s32.totalorder %s17, 1
      %p52 = por %p50, %p51
      %p53 = scmp.ne.s32.totalorder %s45, %s48
      %p54 = scmp.eq.s32.totalorder %s17, 0
      %p55 = por %p53, %p54
      %p56 = scmp.ne.s32.totalorder %s45, %s48
      %p57 = scmp.eq.s32.totalorder %s22, 1
      %p58 = por %p56, %p57
      %p59 = scmp.ne.s32.totalorder %s48, %s49
      %p60 = scmp.eq.s32.totalorder %s22, 0
      %p61 = por %p59, %p60
      %p62 = scmp.ne.s32.totalorder %s48, %s49
      %p63 = scmp.eq.s32.totalorder %s23, 1
      %p64 = por %p62, %p63
      %p66 = scmp.ne.s32.totalorder %s49, %s65
      %p67 = scmp.eq.s32.totalorder %s23, 0
      %p68 = por %p66, %p67
      %s69 = sadd.s32 %s24, %s25
      %p70 = scmp.lt.s32.totalorder %s69, 0
      %s71 = scalar_select %p70, %s69, 0
      %s72 = sadd.s32 %s36, %s32
      %p73 = scmp.lt.s32.totalorder %s72, 0
      %s74 = scalar_select %p73, %s72, 0
      %s75 = ssub.s32 %s71, %s74
      %p76 = scmp.eq.s32.totalorder %s75, 0
      %s78 = sadd.s32 %s77, 1
      %s79 = scalar_select %p76, %s77, %s78
      %p82 = pneg %p76
      %p83 = scmp.eq.s32.totalorder %s17, 1
      %p84 = por %p82, %p83
      %p85 = scmp.ne.s32.totalorder %s77, %s80
      %p86 = scmp.eq.s32.totalorder %s17, 0
      %p87 = por %p85, %p86
      %p88 = scmp.ne.s32.totalorder %s77, %s80
      %p89 = scmp.eq.s32.totalorder %s22, 1
      %p90 = por %p88, %p89
      %p91 = scmp.ne.s32.totalorder %s80, %s81
      %p92 = scmp.eq.s32.totalorder %s22, 0
      %p93 = por %p91, %p92
      %p94 = scmp.ne.s32.totalorder %s80, %s81
      %p95 = scmp.eq.s32.totalorder %s23, 1
      %p96 = por %p94, %p95
      %p98 = scmp.ne.s32.totalorder %s81, %s97
      %p99 = scmp.eq.s32.totalorder %s23, 0
      %p100 = por %p98, %p99
      %s101 = ssub.s32 %s24, %s36
      %p102 = scmp.eq.s32.totalorder %s101, 0
      %s104 = sadd.s32 %s103, 1
      %s105 = scalar_select %p102, %s103, %s104
      %p108 = pneg %p102
      %p109 = scmp.eq.s32.totalorder %s17, 1
      %p110 = por %p108, %p109
      %p111 = scmp.ne.s32.totalorder %s103, %s106
      %p112 = scmp.eq.s32.totalorder %s17, 0
      %p113 = por %p111, %p112
      %p114 = scmp.ne.s32.totalorder %s103, %s106
      %p115 = scmp.eq.s32.totalorder %s22, 1
      %p116 = por %p114, %p115
      %p117 = scmp.ne.s32.totalorder %s106, %s107
      %p118 = scmp.eq.s32.totalorder %s22, 0
      %p119 = por %p117, %p118
      %p120 = scmp.ne.s32.totalorder %s106, %s107
      %p121 = scmp.eq.s32.totalorder %s23, 1
      %p122 = por %p120, %p121
      %p124 = scmp.ne.s32.totalorder %s107, %s123
      %p125 = scmp.eq.s32.totalorder %s23, 0
      %p126 = por %p124, %p125
      %p127 = scmp.le.s32.totalorder 1, %s17
      %p128 = scmp.lt.s32.totalorder %s17, 3
      %p129 = pnand %p127, %p128
      %p130 = pneg %p129
      // Predicated region
      $region9: #{tpu_custom_call.1} parent=5 // pred_check
        _
      $region10: #{tpu_custom_call.1} parent=5 // pred_check_branch
        %132 = sbr.rel (%p129) target = $region12
      $region11: #{tpu_custom_call.1} parent=5 // pred_region
        %s133 = ssub.s32 %s17, 1
      $region12: #{tpu_custom_call.1} parent=5 // pred_fallthru
        _
      %p134 = scmp.lt.s32.totalorder %s17, 2
      // Predicated region
      $region13: #{tpu_custom_call.1} parent=5 // pred_check
        %p135 = pneg %p134
      $region14: #{tpu_custom_call.1} parent=5 // pred_check_branch
        %137 = sbr.rel (%p135) target = $region16
      $region15: #{tpu_custom_call.1} parent=5 // pred_region
        // Predicated region
        $region17: #{tpu_custom_call.1} parent=15 // pred_check
          %p138 = pneg %p55
        $region18: #{tpu_custom_call.1} parent=15 // pred_check_branch
          %140 = sbr.rel (%p138) target = $region20
        $region19: #{tpu_custom_call.1} parent=15 // pred_region
          %s141 = sand.u32 %s45, 1
          %s142 = scalar_lea.sflag [#allocation5], %s141
          %s143 = sand.u32 %s45, 1
          %s144 = smul.addr %s143, 16
          %s145 = scalar_lea.vmem [#allocation4], %s144
          %s146 = sadd.s32 %s24, %s25
          %p147 = scmp.lt.s32.totalorder %s146, 0
          %s148 = scalar_select %p147, %s146, 0
          %s149 = smul.u32 2, %s148
          %151 = vsyncadd %s142, 0
          %s152 = smul.addr %s149, 8
          %s153 = scalar_lea.hbm %s0, %s152
          %s154 = sshll.u32 %s153, 4
          %s155 = int_to_ptr.hbm [resolvable:$true] %s154
          %s156 = sshll.u32 %s145, 4
          %s157 = int_to_ptr.vmem [resolvable:$true] %s156
          %162 = dma.hbm_to_vmem [thread:$0]  %s155, 256, %s157, %s142, 128, 128, 8
        $region20: #{tpu_custom_call.1} parent=15 // pred_fallthru
          _
        // Predicated region
        $region21: #{tpu_custom_call.1} parent=15 // pred_check
          %p163 = pneg %p87
        $region22: #{tpu_custom_call.1} parent=15 // pred_check_branch
          %165 = sbr.rel (%p163) target = $region24
        $region23: #{tpu_custom_call.1} parent=15 // pred_region
          %s166 = sand.u32 %s77, 1
          %s167 = scalar_lea.sflag [#allocation8], %s166
          %s168 = sand.u32 %s77, 1
          %s169 = smul.addr %s168, 16
          %s170 = scalar_lea.vmem [#allocation7], %s169
          %s171 = sadd.s32 %s24, %s25
          %p172 = scmp.lt.s32.totalorder %s171, 0
          %s173 = scalar_select %p172, %s171, 0
          %s174 = smul.u32 2, %s173
          %176 = vsyncadd %s167, 0
          %s177 = smul.addr %s174, 8
          %s178 = scalar_lea.hbm %s1, %s177
          %s179 = sshll.u32 %s178, 4
          %s180 = int_to_ptr.hbm [resolvable:$true] %s179
          %s181 = sshll.u32 %s170, 4
          %s182 = int_to_ptr.vmem [resolvable:$true] %s181
          %187 = dma.hbm_to_vmem [thread:$0]  %s180, 256, %s182, %s167, 128, 128, 8
        $region24: #{tpu_custom_call.1} parent=15 // pred_fallthru
          _
      $region16: #{tpu_custom_call.1} parent=5 // pred_fallthru
        _
      %p188 = scmp.le.s32.totalorder 1, %s17
      %p189 = scmp.lt.s32.totalorder %s17, 3
      %p190 = pnand %p188, %p189
      %p191 = pneg %p190
      // Predicated region
      $region25: #{tpu_custom_call.1} parent=5 // pred_check
        _
      $region26: #{tpu_custom_call.1} parent=5 // pred_check_branch
        %193 = sbr.rel (%p190) target = $region28
      $region27: #{tpu_custom_call.1} parent=5 // pred_region
        %s194 = ssub.s32 %s17, 1
        %s195 = sand.u32 %s48, 1
        %s196 = scalar_lea.sflag [#allocation5], %s195
        %s197 = sand.u32 %s48, 1
        %s198 = smul.addr %s197, 16
        %s199 = scalar_lea.vmem [#allocation4], %s198
        // Predicated region
        $region29: #{tpu_custom_call.1} parent=27 // pred_check
          %p200 = pneg %p61
        $region30: #{tpu_custom_call.1} parent=27 // pred_check_branch
          %202 = sbr.rel (%p200) target = $region32
        $region31: #{tpu_custom_call.1} parent=27 // pred_region
          %204 = dma.done %s196, 256
        $region32: #{tpu_custom_call.1} parent=27 // pred_fallthru
          _
        %s205 = sand.u32 %s80, 1
        %s206 = scalar_lea.sflag [#allocation8], %s205
        %s207 = sand.u32 %s80, 1
        %s208 = smul.addr %s207, 16
        %s209 = scalar_lea.vmem [#allocation7], %s208
        // Predicated region
        $region33: #{tpu_custom_call.1} parent=27 // pred_check
          %p210 = pneg %p93
        $region34: #{tpu_custom_call.1} parent=27 // pred_check_branch
          %212 = sbr.rel (%p210) target = $region36
        $region35: #{tpu_custom_call.1} parent=27 // pred_region
          %214 = dma.done %s206, 256
        $region36: #{tpu_custom_call.1} parent=27 // pred_fallthru
          _
        %s215 = sand.u32 %s48, 1
        %s216 = scalar_lea.sflag [#allocation5], %s215
        %s217 = sand.u32 %s48, 1
        %s218 = smul.addr %s217, 16
        %s219 = scalar_lea.vmem [#allocation4], %s218
        %p220 = pneg %p61
        %p221 = pneg %p58
        %s222 = sand.u32 %s80, 1
        %s223 = scalar_lea.sflag [#allocation8], %s222
        %s224 = sand.u32 %s80, 1
        %s225 = smul.addr %s224, 16
        %s226 = scalar_lea.vmem [#allocation7], %s225
        %p227 = pneg %p93
        %p228 = pneg %p90
        %p229 = pneg %p119
        %p230 = pneg %p116
        %s231 = sand.u32 %s106, 1
        %s232 = scalar_lea.sflag [#allocation6], %s231
        %s233 = sand.u32 %s106, 1
        %s234 = scalar_lea.vmem [#allocation9], %s233
        %s235 = sadd.s32 %s26, %s27
        %p236 = scmp.lt.s32.totalorder %s235, 0
        %s237 = scalar_select %p236, %s235, 0
        %s238 = smul.u32 2, %s237
        %s239 = sadd.s32 %s26, %s27
        %p240 = scmp.lt.s32.totalorder %s239, 0
        %s241 = scalar_select %p240, %s239, 0
        %s242 = smul.u32 2, %s241
        %p243 = scmp.eq.s32.totalorder %s27, 0
        // Predicated region
        $region37: #{tpu_custom_call.1} parent=27 // pred_check
          %p244 = pneg %p243
        $region38: #{tpu_custom_call.1} parent=27 // pred_check_branch
          %246 = sbr.rel (%p244) target = $region40
        $region39: #{tpu_custom_call.1} parent=27 // pred_region
          %247 = vst [vmem:[#allocation2] sm:$0xff] 0.0
          %248 = vst [vmem:[#allocation3] sm:$0xff] 0.0
        $region40: #{tpu_custom_call.1} parent=27 // pred_fallthru
          _
        %s249 = sadd.s32 %s26, %s27
        %p250 = scmp.lt.s32.totalorder %s249, 1
        // Predicated region
        $region41: #{tpu_custom_call.1} parent=27 // pred_check
          %p251 = pneg %p250
        $region42: #{tpu_custom_call.1} parent=27 // pred_check_branch
          %253 = sbr.rel (%p251) target = $region44
        $region43: #{tpu_custom_call.1} parent=27 // pred_region
          %v254 = vld [vmem:[%s199] sm:$0xff]
          %v255 = vld [vmem:[%s199 + $0x8] sm:$0xff]
          %v256 = vld [vmem:[%s209] sm:$0xff]
          %v257 = vld [vmem:[%s209 + $0x8] sm:$0xff]
          %v258 = vmul.f32 %v254, 0.5
          %v259 = vmul.f32 %v255, 0.5
          %v260 = vtanh.pop %v258
          %v261 = vtanh.pop %v259
          %v262 = vmul.f32 %v260, 0.5
          %v263 = vmul.f32 %v261, 0.5
          %v264 = vadd.f32 %v262, 0.5
          %v265 = vadd.f32 %v263, 0.5
          %v266 = vmul.f32 %v264, %v256
          %v267 = vmul.f32 %v265, %v257
          %v268 = vadd.f32 %v264, %v256
          %v269 = vadd.f32 %v265, %v257
          %v270 = vadd.f32 %v266, %v267
          %v271 = vadd.f32 %v268, %v269
          %v272 = vld [vmem:[#allocation2] sm:$0xff]
          %v273 = vadd.f32 %v272, %v270
          %274 = vst [vmem:[#allocation2] sm:$0xff] %v273
          %v275 = vld [vmem:[#allocation3] sm:$0xff]
          %v276 = vadd.f32 %v275, %v271
          %277 = vst [vmem:[#allocation3] sm:$0xff] %v276
        $region44: #{tpu_custom_call.1} parent=27 // pred_fallthru
          _
        // Predicated region
        $region45: #{tpu_custom_call.1} parent=27 // pred_check
          %p278 = pneg %p243
        $region46: #{tpu_custom_call.1} parent=27 // pred_check_branch
          %280 = sbr.rel (%p278) target = $region48
        $region47: #{tpu_custom_call.1} parent=27 // pred_region
          %v281 = vld [vmem:[#allocation2] sm:$0xff]
          %282 = vadd.xlane.f32.xlu0 %v281
          %v283 = vpop.xlane.xlu0 %282
          %v284 = vrot.slane %v283, 4
          %v285 = vadd.f32 %v283, %v284
          %v286 = vrot.slane %v285, 2
          %v287 = vadd.f32 %v285, %v286
          %v288 = vrot.slane %v287, 1
          %v289 = vadd.f32 %v287, %v288
          %s290 = vtos %v289
          %v291 = vld [vmem:[#allocation3] sm:$0xff]
          %292 = vadd.xlane.f32.xlu0 %v291
          %v293 = vpop.xlane.xlu0 %292
          %v294 = vrot.slane %v293, 4
          %v295 = vadd.f32 %v293, %v294
          %v296 = vrot.slane %v295, 2
          %v297 = vadd.f32 %v295, %v296
          %v298 = vrot.slane %v297, 1
          %v299 = vadd.f32 %v297, %v298
          %s300 = vtos %v299
          %v301 = vlaneseq
          %v302 = vand.u32 %v301, 127
          %vm303 = vcmp.eq.s32.totalorder %v302, 0
          %vm304 = vcmp.eq.s32.totalorder %v302, 1
          %v305 = vstv %s300
          %v306 = vsel %vm304, %v305, 0.0
          %v307 = vstv %s290
          %v308 = vsel %vm303, %v307, %v306
          %309 = vst [vmem:[%s234] sm:$0x1] %v308
        $region48: #{tpu_custom_call.1} parent=27 // pred_fallthru
          _
        %s310 = sand.u32 %s106, 1
        %s311 = scalar_lea.sflag [#allocation6], %s310
        %s312 = sand.u32 %s106, 1
        %s313 = scalar_lea.vmem [#allocation9], %s312
        // Predicated region
        $region49: #{tpu_custom_call.1} parent=27 // pred_check
          %p314 = pneg %p116
        $region50: #{tpu_custom_call.1} parent=27 // pred_check_branch
          %316 = sbr.rel (%p314) target = $region52
        $region51: #{tpu_custom_call.1} parent=27 // pred_region
          %318 = vsyncadd %s311, 0
          %s319 = scalar_lea.hbm %s2, %s26
          %s321 = sshll.u32 %s313, 4
          %s322 = int_to_ptr.vmem [resolvable:$true] %s321
          %s323 = sshll.u32 %s319, 4
          %s324 = int_to_ptr.hbm [resolvable:$true] %s323
          %326 = dma.vmem_to_hbm [thread:$0]  %s322, 16, %s324, %s311
        $region52: #{tpu_custom_call.1} parent=27 // pred_fallthru
          _
      $region28: #{tpu_custom_call.1} parent=5 // pred_fallthru
        _
      %p327 = scmp.le.s32.totalorder 2, %s17
      // Predicated region
      $region53: #{tpu_custom_call.1} parent=5 // pred_check
        %p328 = pneg %p327
      $region54: #{tpu_custom_call.1} parent=5 // pred_check_branch
        %330 = sbr.rel (%p328) target = $region56
      $region55: #{tpu_custom_call.1} parent=5 // pred_region
        %s331 = ssub.s32 %s17, 2
        // Predicated region
        $region57: #{tpu_custom_call.1} parent=55 // pred_check
          %p332 = pneg %p122
        $region58: #{tpu_custom_call.1} parent=55 // pred_check_branch
          %334 = sbr.rel (%p332) target = $region60
        $region59: #{tpu_custom_call.1} parent=55 // pred_region
          %s335 = sand.u32 %s107, 1
          %s336 = scalar_lea.sflag [#allocation6], %s335
          %s337 = sand.u32 %s107, 1
          %s338 = scalar_lea.vmem [#allocation9], %s337
          %340 = dma.done %s336, 16
        $region60: #{tpu_custom_call.1} parent=55 // pred_fallthru
          _
      $region56: #{tpu_custom_call.1} parent=5 // pred_fallthru
        _
    $region6: #{tpu_custom_call.1} parent=1 // loop_footer
      %s21 = sadd.s32 1, %s17
    $region7: #{tpu_custom_call.1} parent=1 // loop_footer_branch
      %16 = sbr.rel target = $region3
    $region8: #{tpu_custom_call.1} parent=1 // loop_exit
      _
    %341 = vsyncpa [#allocation5], 1
    %s342 = scalar_lea.sflag [#allocation5], 1
    %343 = vsyncpa %s342, 1
    %344 = vsyncpa [#allocation8], 1
    %s345 = scalar_lea.sflag [#allocation8], 1
    %346 = vsyncpa %s345, 1
    %347 = vsyncpa [#allocation6], 1
    %s348 = scalar_lea.sflag [#allocation6], 1
    %349 = vsyncpa %s348, 1

</llo_original>
